<compile_context>
chip_gen: v7x
topology: tpu7x:2x2x1
jax: 0.10.0
libtpu: 0.0.40
codegen_flags: <defaults>
</compile_context>

<pallas_src>
import functools

import numpy as np

import jax
import jax.numpy as jnp
from jax.experimental import pallas as pl
from jax.experimental.pallas import tpu as pltpu

EPS = 1e-5


# ----------------------------------------------------------------------------
# pltpu.roll shift-convention probe (resolved once, eagerly, outside jit tracing)
# ----------------------------------------------------------------------------
@functools.lru_cache(maxsize=None)
def _roll_sign():
    """Return s such that pltpu.roll(x, s*off, axis)[p] == x[(p + off) % n].

    (np.roll convention -> -1; opposite convention -> +1.)
    """
    def k(x_ref, o_ref):
        o_ref[...] = pltpu.roll(x_ref[...], 1, axis=1)

    x = np.arange(8 * 128, dtype=np.float32).reshape(8, 128)
    y = np.asarray(
        pl.pallas_call(k, out_shape=jax.ShapeDtypeStruct((8, 128), jnp.float32))(x))
    return -1 if np.array_equal(y, np.roll(x, 1, axis=1)) else 1


# ----------------------------------------------------------------------------
# In-kernel fused Conv3d(k=3, pad=1) + BatchNorm3d(training stats) + ReLU
# ----------------------------------------------------------------------------
def _conv3_bn_relu_block(x, w_ref, b, gamma, beta, mask, shifts, inv_count):
    """x: (Cin, M) f32 padded-flat activation (zeros at padding / dead lanes).
    w_ref: (Cout, 27*Cin) bf16 VMEM ref, columns ordered tap-major then channel.
    b/gamma/beta: (Cout, 1) f32.  mask: (1, M) f32, 1.0 at valid interior positions.
    shifts: 27 static lane-roll amounts (one per tap).
    Returns (Cout, M) f32: relu(BN(conv(x))) with padding positions forced to zero.
    """
    # 27 taps via XLU lane rotations; wrap-around only lands on masked padding lanes.
    taps = [x if s == 0 else pltpu.roll(x, s, axis=1) for s in shifts]
    x_stk = jnp.concatenate(taps, axis=0).astype(jnp.bfloat16)        # (27*Cin, M)

    # Single MXU matmul per conv: (Cout, 27*Cin) x (27*Cin, M), f32 accumulation.
    y = jnp.dot(w_ref[...], x_stk, preferred_element_type=jnp.float32) + b

    # BatchNorm (training mode: biased batch statistics over valid positions only).
    ym = y * mask
    mean = jnp.sum(ym, axis=1, keepdims=True) * inv_count             # (Cout, 1)
    yc = y - mean
    var = jnp.sum(yc * yc * mask, axis=1, keepdims=True) * inv_count
    scale = gamma * jax.lax.rsqrt(var + EPS)
    out = jnp.maximum(yc * scale + beta, 0.0)
    # Zero the padding ring / dead lanes so they act as the next conv's zero padding.
    return out * mask


# ----------------------------------------------------------------------------
# Per-resolution-level fused Pallas kernel (2 x [conv+BN+ReLU], optional final 1x1)
# ----------------------------------------------------------------------------
def make_level_caller(n, d, h, w, cin, c1, c2, with_final, num_class):
    dp, hp, wp = d + 2, h + 2, w + 2
    m_real = n * dp * hp * wp
    m = ((m_real + 127) // 128) * 128                  # lane-dense padded flat length
    sgn = _roll_sign()
    offsets = [(kd - 1) * hp * wp + (kh - 1) * wp + (kw - 1)
               for kd in range(3) for kh in range(3) for kw in range(3)]
    shifts = [(sgn * off) % m for off in offsets]
    inv_count = 1.0 / float(n * d * h * w)

    mask_np = np.zeros((n, dp, hp, wp), np.float32)
    mask_np[:, 1:d + 1, 1:h + 1, 1:w + 1] = 1.0
    mask_np = np.pad(mask_np.reshape(1, m_real), ((0, 0), (0, m - m_real)))
    mask_const = jnp.asarray(mask_np)

    out_c = num_class if with_final else c2

    def kernel(*refs):
        if with_final:
            (x_ref, w1_ref, b1_ref, g1_ref, be1_ref,
             w2_ref, b2_ref, g2_ref, be2_ref,
             wf_ref, bf_ref, mask_ref, o_ref) = refs
        else:
            (x_ref, w1_ref, b1_ref, g1_ref, be1_ref,
             w2_ref, b2_ref, g2_ref, be2_ref,
             mask_ref, o_ref) = refs

        x = x_ref[...]                                  # (Cin, M)
        mk = mask_ref[...]                              # (1, M)
        r1 = _conv3_bn_relu_block(x, w1_ref, b1_ref[...], g1_ref[...], be1_ref[...],
                                  mk, shifts, inv_count)            # (C1, M)
        r2 = _conv3_bn_relu_block(r1, w2_ref, b2_ref[...], g2_ref[...], be2_ref[...],
                                  mk, shifts, inv_count)            # (C2, M)
        if with_final:
            # Fused final Conv3d(kernel_size=1): lane-dense (num_class, M) output.
            o_ref[...] = (jnp.dot(wf_ref[...], r2, preferred_element_type=jnp.float32)
                          + bf_ref[...])
        else:
            o_ref[...] = r2

    call = pl.pallas_call(
        kernel,
        out_shape=jax.ShapeDtypeStruct((out_c, m), jnp.float32),
        compiler_params=pltpu.CompilerParams(vmem_limit_bytes=48 * 1024 * 1024),
    )

    def apply(x_cndhw, p1, p2, pf=None):
        # x_cndhw: (Cin, N, D, H, W) -> padded-flat (Cin, M), lane-padded to 128-multiple.
        xp = jnp.pad(x_cndhw, ((0, 0), (0, 0), (1, 1), (1, 1), (1, 1)))
        xf = xp.reshape(cin, m_real)
        if m > m_real:
            xf = jnp.pad(xf, ((0, 0), (0, m - m_real)))
        args = [xf, *p1, *p2]
        if with_final:
            args.extend(pf)
        args.append(mask_const)
        y = call(*args)
        y = y[:, :m_real].reshape(out_c, n, dp, hp, wp)[:, :, 1:d + 1, 1:h + 1, 1:w + 1]
        return y                                         # (Cout, N, D, H, W)

    return apply


# ----------------------------------------------------------------------------
# Plain-JAX glue: MaxPool3d / MaxUnpool3d (index bookkeeping) on (C, N, D, H, W)
# ----------------------------------------------------------------------------
def maxpool3d_2(x):
    """MaxPool3d(kernel_size=2, stride=2) with per-window argmax indices."""
    c, n, d, h, w = x.shape
    xr = x.reshape(c, n, d // 2, 2, h // 2, 2, w // 2, 2)
    xw = xr.transpose(0, 1, 2, 4, 6, 3, 5, 7).reshape(c, n, d // 2, h // 2, w // 2, 8)
    idx = jnp.argmax(xw, axis=-1)
    val = jnp.max(xw, axis=-1)
    return val, idx


def maxunpool3d_2(val, idx):
    """MaxUnpool3d(kernel_size=2, stride=2): scatter each value back, zeros elsewhere."""
    c, n, d, h, w = val.shape
    onehot = jax.nn.one_hot(idx, 8, dtype=val.dtype)            # (C, N, d, h, w, 8)
    win = (val[..., None] * onehot).reshape(c, n, d, h, w, 2, 2, 2)
    win = win.transpose(0, 1, 2, 5, 3, 6, 4, 7)
    return win.reshape(c, n, 2 * d, 2 * h, 2 * w)


def _prep_conv_params(p):
    """PyTorch (Cout, Cin, 3, 3, 3) weight -> lane-dense (Cout, 27*Cin) bf16, columns
    ordered tap-major (kd, kh, kw) then input channel; vectors -> (Cout, 1) f32."""
    w, b, gamma, beta = p
    cout, cin = w.shape[0], w.shape[1]
    w_stk = jnp.transpose(w, (0, 2, 3, 4, 1)).reshape(cout, 27 * cin).astype(jnp.bfloat16)
    return (w_stk,
            b.reshape(cout, 1).astype(jnp.float32),
            gamma.reshape(cout, 1).astype(jnp.float32),
            beta.reshape(cout, 1).astype(jnp.float32))


# ----------------------------------------------------------------------------
# Parameter initialization (deterministic, PyTorch-like fan-in uniform)
# ----------------------------------------------------------------------------
def init_conv(key, cin, cout, k=3):
    k1, k2 = jax.random.split(key)
    fan_in = cin * k * k * k
    bound = 1.0 / (fan_in ** 0.5)
    w = jax.random.uniform(k1, (cout, cin, k, k, k), jnp.float32, -bound, bound)
    b = jax.random.uniform(k2, (cout,), jnp.float32, -bound, bound)
    return w, b


def init_params(key, channel_width=4, num_class=2):
    cw = channel_width
    specs = [
        ("11_en", 1, 1 * cw), ("12_en", 1 * cw, 1 * cw),
        ("21_en", 1 * cw, 2 * cw), ("22_en", 2 * cw, 2 * cw),
        ("31_en", 2 * cw, 4 * cw), ("32_en", 4 * cw, 4 * cw),
        ("41_en", 4 * cw, 8 * cw), ("42_en", 8 * cw, 8 * cw),
        ("51", 8 * cw, 8 * cw), ("52", 8 * cw, 8 * cw),
        ("41_de", 8 * cw, 8 * cw), ("42_de", 8 * cw, 4 * cw),
        ("31_de", 4 * cw, 4 * cw), ("32_de", 4 * cw, 2 * cw),
        ("21_de", 2 * cw, 2 * cw), ("22_de", 2 * cw, 1 * cw),
        ("11_de", 1 * cw, 1 * cw), ("12_de", 1 * cw, 1 * cw),
    ]
    params = {}
    keys = jax.random.split(key, len(specs) + 1)
    for kk, (name, cin, cout) in zip(keys[:-1], specs):
        w, b = init_conv(kk, cin, cout, k=3)
        params[name] = (w, b,
                        jnp.ones((cout,), jnp.float32),
                        jnp.zeros((cout,), jnp.float32))
    wf, bf = init_conv(keys[-1], cw, num_class, k=1)
    params["final"] = (wf, bf)
    return params


# ----------------------------------------------------------------------------
# Full Neuron_SegNet forward
# ----------------------------------------------------------------------------
@jax.jit
def neuron_segnet_forward(x, params):
    n = x.shape[0]
    d0, h0, w0 = x.shape[2], x.shape[3], x.shape[4]
    num_class = params["final"][0].shape[0]

    xc = jnp.transpose(x.astype(jnp.float32), (1, 0, 2, 3, 4))   # (1, N, D, H, W)

    def run_level(xin, shape, name1, name2, final=False):
        cin = xin.shape[0]
        p1, p2 = params[name1], params[name2]
        c1, c2 = p1[0].shape[0], p2[0].shape[0]
        fn = make_level_caller(n, shape[0], shape[1], shape[2], cin, c1, c2,
                               final, num_class)
        pf = None
        if final:
            wf, bf = params["final"]
            pf = (wf.reshape(num_class, c2).astype(jnp.float32),
                  bf.reshape(num_class, 1).astype(jnp.float32))
        return fn(xin, _prep_conv_params(p1), _prep_conv_params(p2), pf)

    s1 = (d0, h0, w0)
    s2 = tuple(v // 2 for v in s1)
    s3 = tuple(v // 2 for v in s2)
    s4 = tuple(v // 2 for v in s3)
    s5 = tuple(v // 2 for v in s4)

    o = run_level(xc, s1, "11_en", "12_en")
    o, i1 = maxpool3d_2(o)
    o = run_level(o, s2, "21_en", "22_en")
    o, i2 = maxpool3d_2(o)
    o = run_level(o, s3, "31_en", "32_en")
    o, i3 = maxpool3d_2(o)
    o = run_level(o, s4, "41_en", "42_en")
    o, i4 = maxpool3d_2(o)
    o = run_level(o, s5, "51", "52")
    o = maxunpool3d_2(o, i4)
    o = run_level(o, s4, "41_de", "42_de")
    o = maxunpool3d_2(o, i3)
    o = run_level(o, s3, "31_de", "32_de")
    o = maxunpool3d_2(o, i2)
    o = run_level(o, s2, "21_de", "22_de")
    o = maxunpool3d_2(o, i1)
    o = run_level(o, s1, "11_de", "12_de", final=True)           # final 1x1 conv fused in
    return jnp.transpose(o, (1, 0, 2, 3, 4))                     # (N, num_class, D, H, W)


if __name__ == "__main__":
    key = jax.random.PRNGKey(0)
    k_param, k_input = jax.random.split(key)
    params = init_params(k_param, channel_width=4, num_class=2)
    _roll_sign()   # resolve pltpu.roll's shift convention once, eagerly, before jit tracing
    # Input (N, C, D, H, W) = (2, 1, 16, 16, 16); spatial must be divisible by 16
    # (four 2x2x2 max-pools).
    x = jax.random.normal(k_input, (2, 1, 16, 16, 16), jnp.float32)
    out = neuron_segnet_forward(x, params)
    out = jax.block_until_ready(out)
    assert out.shape == (2, 2, 16, 16, 16), out.shape
    assert bool(jnp.isfinite(out).all()), "non-finite values in output"
    print("KERNEL_OK")
</pallas_src>

<mosaic_0001>
module attributes {stable_mosaic.version = 11 : i64} {
  func.func @k(%arg0: memref<8x128xf32, #tpu.memory_space<vmem>>, %arg1: memref<8x128xf32, #tpu.memory_space<vmem>>) attributes {dimension_semantics = [], scalar_prefetch = 0 : i64, scratch_operands = 0 : i64, tpu.core_type = #tpu.core_type<tc>} {
    %c0 = arith.constant 0 : index
    %c0_0 = arith.constant 0 : index
    %0 = vector.load %arg0[%c0, %c0_0] : memref<8x128xf32, #tpu.memory_space<vmem>>, vector<8x128xf32>
    %c1_i32 = arith.constant 1 : i32
    %1 = tpu.dynamic_rotate %0 by %c1_i32 dim 1 : vector<8x128xf32>, i32 -> vector<8x128xf32>
    %c0_1 = arith.constant 0 : index
    %c0_2 = arith.constant 0 : index
    %2 = vector.load %arg1[%c0_1, %c0_2] : memref<8x128xf32, #tpu.memory_space<vmem>>, vector<8x128xf32>
    tpu.vector_store %arg1[%c0_1, %c0_2], %1 {strides = array<i32>} : memref<8x128xf32, #tpu.memory_space<vmem>>, vector<8x128xf32>,
    return
  }
}

</mosaic_0001>

<llo_original>
// kernel: tpu_custom_call.1
$region0: #{tpu_custom_call.1}
  #allocation0 [shape = 'u32[]', space=smem, size = 0x4, offset = 0x4, fixed_abs, tag = 'smem constant byte address 0x4 - core index']
  #allocation1 [shape = 'u32[144,128]{1,0:T(1,128)}', space=vmem, size = 0x12000, scoped, tag = 'internal scratch']
  %s0 = inlined_call_operand.hbm [shape: f32[8,128], index: 0, kind: input, shape index: {}]
  %s1 = inlined_call_operand.hbm [shape: f32[8,128], index: 1, kind: output, shape index: {}]
  %s2 = sld [smem:[#allocation0]]
  $region18: #{tpu_custom_call.1} parent=0
    _
  %s4 = ssub.s32 1, %s2
  %s5 = scalar_select 0, %s4, %s2
  $region1: #{tpu_custom_call.1} parent=0
    #allocation2 [shape = 'u8[4096]{0}', space=vmem, size = 0x1000, scoped, tag = 'input window, operand 0, single buffered']
    #allocation3 [shape = 's32[1]{0}', space=sflag, size = 0x4, scoped, tag = 'scoped memory for tpu_custom_call.1']
    #allocation4 [shape = 's32[1]{0}', space=sflag, size = 0x4, scoped, tag = 'scoped memory for tpu_custom_call.1']
    #allocation5 [shape = 'u8[4096]{0}', space=vmem, size = 0x1000, scoped, tag = 'output window, operand 0, single buffered']
    %6 = vsyncpa [#allocation3], 0
    %7 = vsyncpa [#allocation4], 0
    // Predicated region
    $region2: #{tpu_custom_call.1} parent=1 // pred_check
      _
    $region3: #{tpu_custom_call.1} parent=1 // pred_check_branch
      %9 = sbr.rel (0) target = $region5
    $region4: #{tpu_custom_call.1} parent=1 // pred_region
      %s11 = ssub.s32 128, 128
      %12 = vsyncadd [#allocation3], %s11
      %s14 = sshll.u32 [#allocation2], 4
      %s15 = int_to_ptr.vmem [resolvable:$true] %s14
      %17 = dma.hbm_to_vmem [thread:$0]  %s0, 128, %s15, [#allocation3]
    $region5: #{tpu_custom_call.1} parent=1 // pred_fallthru
      _
    // Predicated region
    $region6: #{tpu_custom_call.1} parent=1 // pred_check
      _
    $region7: #{tpu_custom_call.1} parent=1 // pred_check_branch
      %19 = sbr.rel (0) target = $region9
    $region8: #{tpu_custom_call.1} parent=1 // pred_region
      %20 = dma.done [#allocation3], 128
    $region9: #{tpu_custom_call.1} parent=1 // pred_fallthru
      _
    %v21 = vld [vmem:[#allocation2] sm:$0xff]
    %22 = vrot.lane.b32.xlu0 %v21, 1
    %v23 = vpop.permute.xlu0 %22
    %24 = vst [vmem:[#allocation5] sm:$0xff] %v23
    // Predicated region
    $region10: #{tpu_custom_call.1} parent=1 // pred_check
      _
    $region11: #{tpu_custom_call.1} parent=1 // pred_check_branch
      %26 = sbr.rel (0) target = $region13
    $region12: #{tpu_custom_call.1} parent=1 // pred_region
      %s28 = ssub.s32 128, 128
      %29 = vsyncadd [#allocation4], %s28
      %s31 = sshll.u32 [#allocation5], 4
      %s32 = int_to_ptr.vmem [resolvable:$true] %s31
      %34 = dma.vmem_to_hbm [thread:$0]  %s32, 128, %s1, [#allocation4]
    $region13: #{tpu_custom_call.1} parent=1 // pred_fallthru
      _
    // Predicated region
    $region14: #{tpu_custom_call.1} parent=1 // pred_check
      _
    $region15: #{tpu_custom_call.1} parent=1 // pred_check_branch
      %36 = sbr.rel (0) target = $region17
    $region16: #{tpu_custom_call.1} parent=1 // pred_region
      %37 = dma.done [#allocation4], 128
    $region17: #{tpu_custom_call.1} parent=1 // pred_fallthru
      _
    %38 = vsyncpa [#allocation3], 1
    %39 = vsyncpa [#allocation4], 1

</llo_original>
